<compile_context>
chip_gen: v7x
topology: tpu7x:2x2x1
jax: 0.10.0
libtpu: 0.0.40
codegen_flags: <defaults>
</compile_context>

<pallas_src>
import jax
import jax.numpy as jnp
from jax.experimental import pallas as pl
from jax.experimental.pallas import tpu as pltpu  # noqa: F401

P = 2.3        # module's self.p
MAXNORM = 5.2  # module's self.maxnorm
EPS = 1e-7     # ATen renorm epsilon (see reference in __main__)


def _renorm_kernel(x_ref, o_ref):
    x = x_ref[...]                                              # (R, D) f32
    # Column j of the slab is exactly the sub-tensor x[..., j]; its p-norm^p
    # is a sublane (axis=0) reduction.
    pow_sum = jnp.sum(jnp.abs(x) ** P, axis=0, keepdims=True)   # (1, D)
    # norm > maxnorm  <=>  pow_sum > maxnorm**p  (both sides positive, the
    # p-th root is monotone), so the predicate needs no transcendental.
    # Clamped factor maxnorm / norm == maxnorm * pow_sum**(-1/p): one pow,
    # no divide.  (+1e-7 dropped: < 1 ulp of f32 once norm > 5.2.)
    factor = jnp.where(pow_sum > MAXNORM ** P,
                       MAXNORM * pow_sum ** (-1.0 / P),
                       1.0)
    o_ref[...] = x * factor                                     # per-column broadcast


def renorm(x, dim=-1):
    """aten.renorm(x, p=P, dim=dim, maxnorm=MAXNORM) for float32 x, dim = last axis."""
    dim = dim % x.ndim
    assert dim == x.ndim - 1, "kernel implements the module's dim=-1 (last axis)"
    D = x.shape[-1]
    R = x.size // D
    # dim=-1 is the contiguous minor axis -> this reshape is a free view; no
    # physical transpose on either side of the kernel.
    x2d = x.reshape(R, D)

    full = pl.BlockSpec((R, D), lambda: (0, 0))   # full-array block, grid=()
    out2d = pl.pallas_call(
        _renorm_kernel,
        out_shape=jax.ShapeDtypeStruct((R, D), jnp.float32),
        grid=(),
        in_specs=[full],
        out_specs=full,
        input_output_aliases={0: 0},   # donate/alias HBM buffer when caller permits
    )(x2d)

    return out2d.reshape(x.shape)


if __name__ == "__main__":
    # Input shape from the annotated forward: (1, 4, 5, 2) float32.
    key = jax.random.PRNGKey(0)
    x = jax.random.normal(key, (1, 4, 5, 2), dtype=jnp.float32)
    # Scale the two last-dim slices differently so one p-norm exceeds maxnorm
    # (clamped) and the other does not (passes through unchanged).
    x = x * jnp.array([3.0, 0.2], dtype=jnp.float32)

    # Pure-JAX reference with exact ATen renorm semantics (computed before the
    # kernel call so the aliased input buffer is not needed afterwards).
    reduce_dims = tuple(range(x.ndim - 1))
    norms = jnp.sum(jnp.abs(x) ** P, axis=reduce_dims, keepdims=True) ** (1.0 / P)
    ref = x * jnp.where(norms > MAXNORM, MAXNORM / (norms + EPS), 1.0)
    ref = jax.block_until_ready(ref)

    out = renorm(x, dim=-1)
    out = jax.block_until_ready(out)

    assert out.shape == x.shape
    assert jnp.allclose(out, ref, atol=1e-5, rtol=1e-5)
    print("KERNEL_OK")
</pallas_src>

<mosaic_0001>
module attributes {stable_mosaic.version = 11 : i64} {
  func.func @_renorm_kernel(%arg0: memref<20x2xf32, #tpu.memory_space<vmem>>, %arg1: memref<20x2xf32, #tpu.memory_space<vmem>>) attributes {dimension_semantics = [], scalar_prefetch = 0 : i64, scratch_operands = 0 : i64, tpu.core_type = #tpu.core_type<tc>} {
    %c0 = arith.constant 0 : index
    %c0_0 = arith.constant 0 : index
    %0 = vector.load %arg0[%c0, %c0_0] : memref<20x2xf32, #tpu.memory_space<vmem>>, vector<20x2xf32>
    %1 = math.absf %0 : vector<20x2xf32>
    %cst = arith.constant 2.300000e+00 : f32
    %2 = vector.broadcast %cst : f32 to vector<20x2xf32>
    %3 = math.powf %1, %2 : vector<20x2xf32>
    %cst_1 = arith.constant dense<0.000000e+00> : vector<2xf32>
    %4 = vector.multi_reduction <add>, %3, %cst_1 [0] : vector<20x2xf32> to vector<2xf32>
    %5 = vector.shape_cast %4 : vector<2xf32> to vector<1x2xf32>
    %cst_2 = arith.constant 44.3412247 : f32
    %6 = vector.broadcast %cst_2 : f32 to vector<1x2xf32>
    %7 = arith.cmpf ogt, %5, %6 : vector<1x2xf32>
    %cst_3 = arith.constant -0.434782594 : f32
    %8 = vector.broadcast %cst_3 : f32 to vector<1x2xf32>
    %9 = math.powf %5, %8 : vector<1x2xf32>
    %cst_4 = arith.constant 5.200000e+00 : f32
    %10 = vector.broadcast %cst_4 : f32 to vector<1x2xf32>
    %11 = arith.mulf %10, %9 : vector<1x2xf32>
    %cst_5 = arith.constant 1.000000e+00 : f32
    %12 = vector.broadcast %cst_5 : f32 to vector<1x2xf32>
    %13 = arith.select %7, %11, %12 : vector<1x2xi1>, vector<1x2xf32>
    %14 = vector.broadcast %13 : vector<1x2xf32> to vector<20x2xf32>
    %15 = arith.mulf %0, %14 : vector<20x2xf32>
    %c0_6 = arith.constant 0 : index
    %c0_7 = arith.constant 0 : index
    %16 = vector.load %arg1[%c0_6, %c0_7] : memref<20x2xf32, #tpu.memory_space<vmem>>, vector<20x2xf32>
    tpu.vector_store %arg1[%c0_6, %c0_7], %15 {strides = array<i32>} : memref<20x2xf32, #tpu.memory_space<vmem>>, vector<20x2xf32>,
    return
  }
}

</mosaic_0001>

<llo_original>
// kernel: tpu_custom_call.1
$region0: #{tpu_custom_call.1}
  #allocation0 [shape = 'u32[]', space=smem, size = 0x4, offset = 0x4, fixed_abs, tag = 'smem constant byte address 0x4 - core index']
  #allocation1 [shape = 'u32[144,128]{1,0:T(1,128)}', space=vmem, size = 0x12000, scoped, tag = 'internal scratch']
  %s0 = inlined_call_operand.vmem [shape: f32[20,2], index: 0, kind: input, shape index: {}, may-alias: {0,1}]
  %s1 = inlined_call_operand.vmem [shape: f32[20,2], index: 1, kind: output, shape index: {}, may-alias: {0,1}]
  %s2 = sld [smem:[#allocation0]]
  $region14: #{tpu_custom_call.1} parent=0
    _
  %s4 = ssub.s32 1, %s2
  %s5 = scalar_select 0, %s4, %s2
  // Predicated region
  $region2: #{tpu_custom_call.1} parent=0 // pred_check
    _
  $region3: #{tpu_custom_call.1} parent=0 // pred_check_branch
    %7 = sbr.rel (0) target = $region5
  $region4: #{tpu_custom_call.1} parent=0 // pred_region
    _
  $region5: #{tpu_custom_call.1} parent=0 // pred_fallthru
    _
  %v8 = vld [vmem:[%s0] sm:$0xff]
  %v9 = vld [vmem:[%s0 + $0x8] sm:$0xff]
  %v10 = vld [vmem:[%s0 + $0x10] sm:$0xf]
  %v11 = vand.u32 2147483647, %v8
  %v12 = vand.u32 2147483647, %v9
  %v13 = vand.u32 2147483647, %v10
  %v14 = vpow.f32 %v11, 2.3
  %v15 = vpow.f32 %v12, 2.3
  %v16 = vpow.f32 %v13, 2.3
  %vm17 = vcmask 15360
  %v18 = vsel %vm17, %v14, 0.0
  %v19 = vsel %vm17, %v15, 0.0
  %v20 = vadd.f32 %v18, %v19
  %vm21 = vcmask 11264
  %v22 = vsel %vm21, %v16, 0.0
  %v23 = vadd.f32 %v20, %v22
  %v24 = vrot.slane %v23, 4
  %v25 = vadd.f32 %v23, %v24
  %v26 = vrot.slane %v25, 2
  %v27 = vadd.f32 %v25, %v26
  %v28 = vrot.slane %v27, 1
  %v29 = vadd.f32 %v27, %v28
  %vm30 = vcmp.gt.f32.partialorder %v29, 44.341225
  %v31 = vpow.f32 %v29, -0.4347826
  %v32 = vmul.f32 %v31, 5.2
  %v33 = vsel %vm30, %v32, 1.0
  %v34 = vmul.f32 %v8, %v33
  %v35 = vmul.f32 %v9, %v33
  %v36 = vmul.f32 %v10, %v33
  %37 = vst.msk [vmem:[%s1] sm:$0xff] %vm17, %v34
  %38 = vst.msk [vmem:[%s1 + $0x8] sm:$0xff] %vm17, %v35
  %39 = vst.msk [vmem:[%s1 + $0x10] sm:$0xf] %vm21, %v36
  // Predicated region
  $region6: #{tpu_custom_call.1} parent=0 // pred_check
    _
  $region7: #{tpu_custom_call.1} parent=0 // pred_check_branch
    %41 = sbr.rel (0) target = $region9
  $region8: #{tpu_custom_call.1} parent=0 // pred_region
    _
  $region9: #{tpu_custom_call.1} parent=0 // pred_fallthru
    _
  // Predicated region
  $region10: #{tpu_custom_call.1} parent=0 // pred_check
    _
  $region11: #{tpu_custom_call.1} parent=0 // pred_check_branch
    %43 = sbr.rel (0) target = $region13
  $region12: #{tpu_custom_call.1} parent=0 // pred_region
    _
  $region13: #{tpu_custom_call.1} parent=0 // pred_fallthru
    _

</llo_original>
